<compile_context>
chip_gen: v7x
topology: tpu7x:2x2x1
jax: 0.10.0
libtpu: 0.0.40
codegen_flags: <defaults>
</compile_context>

<pallas_src>
import functools
import math

import numpy as np
import jax
import jax.numpy as jnp
from jax import lax
from jax.experimental import pallas as pl
from jax.experimental.pallas import tpu as pltpu

NEG_SLOPE = 0.1
KSIZE = 3
DILATIONS = (1, 2, 4)   # c1, c2, c3
FACTOR = 4


def _round_up(v, m):
    return -(-v // m) * m


def _downsample_kernel(xd_ref, wpack_ref, bpack_ref, o_ref, *,
                       cin, cout, rpad, lout, mm_dtype):
    nl = xd_ref.shape[1]

    # Pad activations to rpad (multiple-of-8) rows once; padded rows stay zero
    # through the whole network (weights/biases are zero-padded to match).
    xd = xd_ref[...].astype(jnp.float32)
    if cin < rpad:
        xd = jnp.concatenate(
            [xd, jnp.zeros((rpad - cin, nl), jnp.float32)], axis=0)

    # Per-segment lane position and causal masks for every distinct shift,
    # computed ONCE per block (reused as a multiply inside dcc()).
    pos = lax.broadcasted_iota(jnp.int32, (rpad, nl), 1) % lout
    shifts = sorted({(KSIZE - 1 - k) * d
                     for d in DILATIONS for k in range(KSIZE)} - {0})
    masks = {s: (pos >= s).astype(jnp.float32) for s in shifts}

    def mdot(w, h):
        return jnp.dot(w.astype(mm_dtype), h.astype(mm_dtype),
                       preferred_element_type=jnp.float32)

    def leaky(v):
        return jnp.maximum(v, NEG_SLOPE * v)

    def dcc(h, wbase, bidx, d):
        # Dilated causal conv: out[t] = sum_k W_k @ h[t - (K-1-k)*d].
        acc = mdot(wpack_ref[wbase + KSIZE - 1], h)          # shift-0 tap
        for k in range(KSIZE - 1):
            s = (KSIZE - 1 - k) * d
            hk = pltpu.roll(h, shift=s, axis=1) * masks[s]   # XLU roll + VPU mul
            acc = acc + mdot(wpack_ref[wbase + k], hk)
        return acc + bpack_ref[bidx]

    # Residual 1x1 conv.
    res = mdot(wpack_ref[0], xd) + bpack_ref[0]

    h = leaky(xd)
    h = dcc(h, 1, 1, DILATIONS[0])
    h = leaky(h)
    h = dcc(h, 4, 2, DILATIONS[1])
    h = leaky(h)
    h = dcc(h, 7, 3, DILATIONS[2])

    out = h + res
    o_ref[...] = out[0:cout, :].astype(o_ref.dtype)


def _interp_taps(L, Lout, factor):
    """Indices/weights reproducing F.interpolate(mode='linear',
    align_corners=False, scale_factor=1/factor): src = factor*(i+0.5) - 0.5."""
    src = factor * (np.arange(Lout, dtype=np.float64) + 0.5) - 0.5
    src = np.clip(src, 0.0, L - 1)
    i0 = np.minimum(np.floor(src).astype(np.int64), L - 1)
    i1 = np.minimum(i0 + 1, L - 1)
    frac = (src - i0).astype(np.float32)
    # Integer factor => constant fractional part => scalar lerp weights.
    assert np.allclose(frac, frac[0]), "non-constant interp weights (non-integer factor?)"
    return i0, i1, float(1.0 - frac[0]), float(frac[0])


def downsample(x, params, factor=FACTOR, matmul_dtype=jnp.float32):
    """x: (N, Cin, L) float32 -> (N, Cout, floor(L/factor)).

    params = (Wres (Cout,Cin), bres (Cout,),
              W1 (Cin,Cin,K), b1 (Cin,), W2 (Cin,Cin,K), b2 (Cin,),
              W3 (Cout,Cin,K), b3 (Cout,))    # PyTorch Conv1d (out,in,k) layout

    matmul_dtype: set to jnp.bfloat16 on v6e/v7x to halve MXU operand width
    (accumulation stays f32); default f32 keeps bit parity with the reference.
    """
    N, Cin, L = x.shape
    Wres, bres, W1, b1, W2, b2, W3, b3 = params
    Cout = Wres.shape[0]
    Lout = int(math.floor(L / factor))
    rpad = _round_up(max(Cin, Cout), 8)

    # ---- interpolation: gather + constant-weight lerp fused in the wrapper --
    i0, i1, w0, w1 = _interp_taps(L, Lout, factor)
    xd = w0 * x[:, :, i0] + w1 * x[:, :, i1]                   # (N, Cin, Lout)

    # ---- fuse batch onto the lane axis: (Cin, N*Lout) ------------------------
    xd = jnp.transpose(xd, (1, 0, 2)).reshape(Cin, N * Lout)
    NL = N * Lout

    # ---- pack weights tile-aligned: (10, rpad, rpad), (4, rpad, 1) ----------
    def pad_mat(w):
        return jnp.pad(w, ((0, rpad - w.shape[0]), (0, rpad - w.shape[1])))

    mats = ([Wres]
            + [W1[:, :, k] for k in range(KSIZE)]
            + [W2[:, :, k] for k in range(KSIZE)]
            + [W3[:, :, k] for k in range(KSIZE)])
    wpack = jnp.stack([pad_mat(m) for m in mats], axis=0)      # (10, rpad, rpad)

    def pad_bias(b):
        return jnp.pad(b, (0, rpad - b.shape[0])).reshape(rpad, 1)

    bpack = jnp.stack([pad_bias(b) for b in (bres, b1, b2, b3)], axis=0)

    # ---- block selection: largest lane-dense (multiple-of-128) block that
    # fits the VMEM budget; prefer grid >= 2 so both v7x TensorCores run. -----
    bytes_per_lane = 4 * (2 * Cin + 2 * Cout + 12 * rpad)      # dbl-buffered I/O + live f32
    budget = 12 * 1024 * 1024                                  # conservative (v7x has 64 MiB VMEM)
    max_lanes = max(128, (budget // bytes_per_lane) // 128 * 128)

    divisors = [d for d in range(1, N + 1) if N % d == 0]
    aligned = [d for d in divisors if (d * Lout) % 128 == 0]
    fit = [d for d in aligned if d * Lout <= max_lanes]

    if fit:
        pref = [d for d in fit if N // d >= 2]                 # keep both TCs busy on v7x
        NB = max(pref) if pref else max(fit)
        nl_blk = NB * Lout
        NL_pad = NL
        grid = (N // NB,)
    elif aligned:
        NB = min(aligned)                                      # smallest aligned block if over soft budget
        nl_blk = NB * Lout
        NL_pad = NL
        grid = (N // NB,)
    else:
        # No lane-dense divisor of N: pad the fused lane axis to a multiple of
        # 128 so output stores are unmasked vst; run a single block.
        NL_pad = _round_up(NL, 128)
        nl_blk = NL_pad
        grid = (1,)
        xd = jnp.pad(xd, ((0, 0), (0, NL_pad - NL)))

    n_mm = 1 + 3 * KSIZE
    cost = pl.CostEstimate(
        flops=2 * n_mm * rpad * rpad * NL_pad + 24 * rpad * NL_pad,
        transcendentals=0,
        bytes_accessed=4 * (Cin * NL_pad + Cout * NL_pad
                            + int(wpack.size) + int(bpack.size)))

    kernel = functools.partial(_downsample_kernel, cin=Cin, cout=Cout,
                               rpad=rpad, lout=Lout, mm_dtype=matmul_dtype)
    out2d = pl.pallas_call(
        kernel,
        out_shape=jax.ShapeDtypeStruct((Cout, NL_pad), x.dtype),
        grid=grid,
        in_specs=[
            pl.BlockSpec((Cin, nl_blk), lambda i: (0, i)),
            pl.BlockSpec(wpack.shape, lambda i: (0, 0, 0)),   # fetched once
            pl.BlockSpec(bpack.shape, lambda i: (0, 0, 0)),
        ],
        out_specs=pl.BlockSpec((Cout, nl_blk), lambda i: (0, i)),
        compiler_params=pltpu.CompilerParams(
            dimension_semantics=("parallel",),
            vmem_limit_bytes=32 * 1024 * 1024),
        cost_estimate=cost,
    )(xd, wpack, bpack)

    out2d = out2d[:, :NL]
    return jnp.transpose(out2d.reshape(Cout, N, Lout), (1, 0, 2))


# ---------------------------------------------------------------------------
# Pure-JAX reference (independent formulation: explicit interpolation matrix
# and explicit zero-padded dilated convs).
# ---------------------------------------------------------------------------
def _make_downsample_matrix(L, factor):
    Lout = int(math.floor(L / factor))
    D = np.zeros((L, Lout), np.float32)
    for i in range(Lout):
        src = min(max(float(factor) * (i + 0.5) - 0.5, 0.0), L - 1)
        j0 = min(int(math.floor(src)), L - 1)
        frac = src - j0
        j1 = min(j0 + 1, L - 1)
        D[j0, i] += 1.0 - frac
        D[j1, i] += frac
    return jnp.asarray(D)


def ref_downsample(x, params, factor=FACTOR, slope=NEG_SLOPE):
    Wres, bres, W1, b1, W2, b2, W3, b3 = params
    N, Cin, L = x.shape
    D = _make_downsample_matrix(L, factor)
    xd = jnp.einsum('ncl,lm->ncm', x, D)
    res = jnp.einsum('oc,ncm->nom', Wres, xd) + bres[None, :, None]

    def leaky(v):
        return jnp.where(v >= 0, v, slope * v)

    def dcc_ref(h, W, b, d):
        pad = (KSIZE - 1) * d
        hp = jnp.pad(h, ((0, 0), (0, 0), (pad, 0)))
        Lh = h.shape[2]
        out = sum(jnp.einsum('oc,ncm->nom', W[:, :, k], hp[:, :, k * d:k * d + Lh])
                  for k in range(KSIZE))
        return out + b[None, :, None]

    h = leaky(xd)
    h = dcc_ref(h, W1, b1, DILATIONS[0])
    h = leaky(h)
    h = dcc_ref(h, W2, b2, DILATIONS[1])
    h = leaky(h)
    h = dcc_ref(h, W3, b3, DILATIONS[2])
    return h + res


if __name__ == "__main__":
    # input_channels=4, output_channels=8, factor=4, input length 64 -> output 16
    N, Cin, Cout, L = 2, 4, 8, 64

    key = jax.random.PRNGKey(0)
    ks = jax.random.split(key, 9)
    x = jax.random.normal(ks[0], (N, Cin, L), jnp.float32)

    # Conv weights in PyTorch Conv1d layout (out_channels, in_channels, k).
    Wres = 0.2 * jax.random.normal(ks[1], (Cout, Cin), jnp.float32)
    bres = 0.1 * jax.random.normal(ks[2], (Cout,), jnp.float32)
    W1 = 0.2 * jax.random.normal(ks[3], (Cin, Cin, KSIZE), jnp.float32)
    b1 = 0.1 * jax.random.normal(ks[4], (Cin,), jnp.float32)
    W2 = 0.2 * jax.random.normal(ks[5], (Cin, Cin, KSIZE), jnp.float32)
    b2 = 0.1 * jax.random.normal(ks[6], (Cin,), jnp.float32)
    W3 = 0.2 * jax.random.normal(ks[7], (Cout, Cin, KSIZE), jnp.float32)
    b3 = 0.1 * jax.random.normal(ks[8], (Cout,), jnp.float32)
    params = (Wres, bres, W1, b1, W2, b2, W3, b3)

    out = jax.block_until_ready(downsample(x, params))
    ref = ref_downsample(x, params)
    np.testing.assert_allclose(np.asarray(out), np.asarray(ref), rtol=1e-5, atol=1e-5)
    print("KERNEL_OK")
</pallas_src>

<mosaic_0001>
module attributes {stable_mosaic.version = 11 : i64} {
  func.func @_downsample_kernel(%arg0: i32, %arg1: memref<4x128xf32, #tpu.memory_space<vmem>>, %arg2: memref<10x8x8xf32, #tpu.memory_space<vmem>>, %arg3: memref<4x8x1xf32, #tpu.memory_space<vmem>>, %arg4: memref<8x128xf32, #tpu.memory_space<vmem>>) attributes {dimension_semantics = [#tpu.dimension_semantics<parallel>], iteration_bounds = array<i64: 1>, scalar_prefetch = 0 : i64, scratch_operands = 0 : i64, tpu.core_type = #tpu.core_type<tc>, window_params = [{transform_indices = @transform_0, window_bounds = array<i64: 4, 128>}, {pipeline_mode = #tpu.pipeline_mode<synchronous>, transform_indices = @transform_1, window_bounds = array<i64: 10, 8, 8>}, {pipeline_mode = #tpu.pipeline_mode<synchronous>, transform_indices = @transform_2, window_bounds = array<i64: 4, 8, 1>}, {transform_indices = @transform_3, window_bounds = array<i64: 8, 128>}]} {
    %c0 = arith.constant 0 : index
    %c0_0 = arith.constant 0 : index
    %0 = vector.load %arg1[%c0, %c0_0] : memref<4x128xf32, #tpu.memory_space<vmem>>, vector<4x128xf32>
    %cst = arith.constant 0.000000e+00 : f32
    %1 = vector.broadcast %cst : f32 to vector<4x128xf32>
    %2 = tpu.concatenate %0, %1 in 0 : vector<4x128xf32>, vector<4x128xf32> -> vector<8x128xf32>
    %3 = tpu.iota {dimensions = array<i32: 1>} : vector<8x128xi32>
    %c16_i32 = arith.constant 16 : i32
    %c0_i32 = arith.constant 0 : i32
    %4 = arith.cmpi eq, %c16_i32, %c0_i32 : i32
    %c1_i32 = arith.constant 1 : i32
    %5 = arith.select %4, %c1_i32, %c16_i32 : i32
    %6 = vector.broadcast %5 : i32 to vector<8x128xi32>
    %7 = arith.remsi %3, %6 : vector<8x128xi32>
    %c0_i32_1 = arith.constant 0 : i32
    %8 = vector.broadcast %c0_i32_1 : i32 to vector<8x128xi32>
    %9 = arith.cmpi ne, %7, %8 : vector<8x128xi32>
    %c0_i32_2 = arith.constant 0 : i32
    %10 = vector.broadcast %c0_i32_2 : i32 to vector<8x128xi32>
    %11 = arith.cmpi slt, %7, %10 : vector<8x128xi32>
    %c0_i32_3 = arith.constant 0 : i32
    %12 = arith.cmpi slt, %5, %c0_i32_3 : i32
    %13 = vector.broadcast %12 : i1 to vector<8x128xi1>
    %14 = vector.broadcast %13 : vector<8x128xi1> to vector<8x128xi1>
    %15 = arith.xori %11, %14 : vector<8x128xi1>
    %16 = arith.andi %15, %9 : vector<8x128xi1>
    %17 = vector.broadcast %5 : i32 to vector<8x128xi32>
    %18 = arith.addi %7, %17 : vector<8x128xi32>
    %19 = arith.select %16, %18, %7 : vector<8x128xi1>, vector<8x128xi32>
    %c1_i32_4 = arith.constant 1 : i32
    %20 = vector.broadcast %c1_i32_4 : i32 to vector<8x128xi32>
    %21 = arith.cmpi sge, %19, %20 : vector<8x128xi32>
    %22 = arith.extui %21 : vector<8x128xi1> to vector<8x128xi32>
    %23 = arith.sitofp %22 : vector<8x128xi32> to vector<8x128xf32>
    %c2_i32 = arith.constant 2 : i32
    %24 = vector.broadcast %c2_i32 : i32 to vector<8x128xi32>
    %25 = arith.cmpi sge, %19, %24 : vector<8x128xi32>
    %26 = arith.extui %25 : vector<8x128xi1> to vector<8x128xi32>
    %27 = arith.sitofp %26 : vector<8x128xi32> to vector<8x128xf32>
    %c4_i32 = arith.constant 4 : i32
    %28 = vector.broadcast %c4_i32 : i32 to vector<8x128xi32>
    %29 = arith.cmpi sge, %19, %28 : vector<8x128xi32>
    %30 = arith.extui %29 : vector<8x128xi1> to vector<8x128xi32>
    %31 = arith.sitofp %30 : vector<8x128xi32> to vector<8x128xf32>
    %c8_i32 = arith.constant 8 : i32
    %32 = vector.broadcast %c8_i32 : i32 to vector<8x128xi32>
    %33 = arith.cmpi sge, %19, %32 : vector<8x128xi32>
    %34 = arith.extui %33 : vector<8x128xi1> to vector<8x128xi32>
    %35 = arith.sitofp %34 : vector<8x128xi32> to vector<8x128xf32>
    %c0_5 = arith.constant 0 : index
    %c0_6 = arith.constant 0 : index
    %c0_7 = arith.constant 0 : index
    %36 = vector.load %arg2[%c0_5, %c0_6, %c0_7] : memref<10x8x8xf32, #tpu.memory_space<vmem>>, vector<1x8x8xf32>
    %37 = vector.shape_cast %36 : vector<1x8x8xf32> to vector<8x8xf32>
    %cst_8 = arith.constant dense<0.000000e+00> : vector<8x128xf32>
    %38 = tpu.matmul %37, %2, %cst_8 {dimension_numbers = #tpu.dot_dimension_numbers<[1], [0], [0], [1], [0, 0, 1, 1], [], []>} : vector<8x8xf32>, vector<8x128xf32>, vector<8x128xf32> -> vector<8x128xf32>
    %c0_9 = arith.constant 0 : index
    %c0_10 = arith.constant 0 : index
    %c0_11 = arith.constant 0 : index
    %39 = vector.load %arg3[%c0_9, %c0_10, %c0_11] : memref<4x8x1xf32, #tpu.memory_space<vmem>>, vector<1x8x1xf32>
    %40 = vector.shape_cast %39 : vector<1x8x1xf32> to vector<8x1xf32>
    %41 = vector.broadcast %40 : vector<8x1xf32> to vector<8x128xf32>
    %42 = arith.addf %38, %41 : vector<8x128xf32>
    %cst_12 = arith.constant 1.000000e-01 : f32
    %43 = vector.broadcast %cst_12 : f32 to vector<8x128xf32>
    %44 = arith.mulf %43, %2 : vector<8x128xf32>
    %45 = arith.maximumf %2, %44 : vector<8x128xf32>
    %c3 = arith.constant 3 : index
    %c0_13 = arith.constant 0 : index
    %c0_14 = arith.constant 0 : index
    %46 = vector.load %arg2[%c3, %c0_13, %c0_14] : memref<10x8x8xf32, #tpu.memory_space<vmem>>, vector<1x8x8xf32>
    %47 = vector.shape_cast %46 : vector<1x8x8xf32> to vector<8x8xf32>
    %cst_15 = arith.constant dense<0.000000e+00> : vector<8x128xf32>
    %48 = tpu.matmul %47, %45, %cst_15 {dimension_numbers = #tpu.dot_dimension_numbers<[1], [0], [0], [1], [0, 0, 1, 1], [], []>} : vector<8x8xf32>, vector<8x128xf32>, vector<8x128xf32> -> vector<8x128xf32>
    %c2_i32_16 = arith.constant 2 : i32
    %49 = tpu.dynamic_rotate %45 by %c2_i32_16 dim 1 : vector<8x128xf32>, i32 -> vector<8x128xf32>
    %50 = arith.mulf %49, %27 : vector<8x128xf32>
    %c1 = arith.constant 1 : index
    %c0_17 = arith.constant 0 : index
    %c0_18 = arith.constant 0 : index
    %51 = vector.load %arg2[%c1, %c0_17, %c0_18] : memref<10x8x8xf32, #tpu.memory_space<vmem>>, vector<1x8x8xf32>
    %52 = vector.shape_cast %51 : vector<1x8x8xf32> to vector<8x8xf32>
    %cst_19 = arith.constant dense<0.000000e+00> : vector<8x128xf32>
    %53 = tpu.matmul %52, %50, %cst_19 {dimension_numbers = #tpu.dot_dimension_numbers<[1], [0], [0], [1], [0, 0, 1, 1], [], []>} : vector<8x8xf32>, vector<8x128xf32>, vector<8x128xf32> -> vector<8x128xf32>
    %54 = arith.addf %48, %53 : vector<8x128xf32>
    %c1_i32_20 = arith.constant 1 : i32
    %55 = tpu.dynamic_rotate %45 by %c1_i32_20 dim 1 : vector<8x128xf32>, i32 -> vector<8x128xf32>
    %56 = arith.mulf %55, %23 : vector<8x128xf32>
    %c2 = arith.constant 2 : index
    %c0_21 = arith.constant 0 : index
    %c0_22 = arith.constant 0 : index
    %57 = vector.load %arg2[%c2, %c0_21, %c0_22] : memref<10x8x8xf32, #tpu.memory_space<vmem>>, vector<1x8x8xf32>
    %58 = vector.shape_cast %57 : vector<1x8x8xf32> to vector<8x8xf32>
    %cst_23 = arith.constant dense<0.000000e+00> : vector<8x128xf32>
    %59 = tpu.matmul %58, %56, %cst_23 {dimension_numbers = #tpu.dot_dimension_numbers<[1], [0], [0], [1], [0, 0, 1, 1], [], []>} : vector<8x8xf32>, vector<8x128xf32>, vector<8x128xf32> -> vector<8x128xf32>
    %60 = arith.addf %54, %59 : vector<8x128xf32>
    %c1_24 = arith.constant 1 : index
    %c0_25 = arith.constant 0 : index
    %c0_26 = arith.constant 0 : index
    %61 = vector.load %arg3[%c1_24, %c0_25, %c0_26] : memref<4x8x1xf32, #tpu.memory_space<vmem>>, vector<1x8x1xf32>
    %62 = vector.shape_cast %61 : vector<1x8x1xf32> to vector<8x1xf32>
    %63 = vector.broadcast %62 : vector<8x1xf32> to vector<8x128xf32>
    %64 = arith.addf %60, %63 : vector<8x128xf32>
    %cst_27 = arith.constant 1.000000e-01 : f32
    %65 = vector.broadcast %cst_27 : f32 to vector<8x128xf32>
    %66 = arith.mulf %65, %64 : vector<8x128xf32>
    %67 = arith.maximumf %64, %66 : vector<8x128xf32>
    %c6 = arith.constant 6 : index
    %c0_28 = arith.constant 0 : index
    %c0_29 = arith.constant 0 : index
    %68 = vector.load %arg2[%c6, %c0_28, %c0_29] : memref<10x8x8xf32, #tpu.memory_space<vmem>>, vector<1x8x8xf32>
    %69 = vector.shape_cast %68 : vector<1x8x8xf32> to vector<8x8xf32>
    %cst_30 = arith.constant dense<0.000000e+00> : vector<8x128xf32>
    %70 = tpu.matmul %69, %67, %cst_30 {dimension_numbers = #tpu.dot_dimension_numbers<[1], [0], [0], [1], [0, 0, 1, 1], [], []>} : vector<8x8xf32>, vector<8x128xf32>, vector<8x128xf32> -> vector<8x128xf32>
    %c4_i32_31 = arith.constant 4 : i32
    %71 = tpu.dynamic_rotate %67 by %c4_i32_31 dim 1 : vector<8x128xf32>, i32 -> vector<8x128xf32>
    %72 = arith.mulf %71, %31 : vector<8x128xf32>
    %c4 = arith.constant 4 : index
    %c0_32 = arith.constant 0 : index
    %c0_33 = arith.constant 0 : index
    %73 = vector.load %arg2[%c4, %c0_32, %c0_33] : memref<10x8x8xf32, #tpu.memory_space<vmem>>, vector<1x8x8xf32>
    %74 = vector.shape_cast %73 : vector<1x8x8xf32> to vector<8x8xf32>
    %cst_34 = arith.constant dense<0.000000e+00> : vector<8x128xf32>
    %75 = tpu.matmul %74, %72, %cst_34 {dimension_numbers = #tpu.dot_dimension_numbers<[1], [0], [0], [1], [0, 0, 1, 1], [], []>} : vector<8x8xf32>, vector<8x128xf32>, vector<8x128xf32> -> vector<8x128xf32>
    %76 = arith.addf %70, %75 : vector<8x128xf32>
    %c2_i32_35 = arith.constant 2 : i32
    %77 = tpu.dynamic_rotate %67 by %c2_i32_35 dim 1 : vector<8x128xf32>, i32 -> vector<8x128xf32>
    %78 = arith.mulf %77, %27 : vector<8x128xf32>
    %c5 = arith.constant 5 : index
    %c0_36 = arith.constant 0 : index
    %c0_37 = arith.constant 0 : index
    %79 = vector.load %arg2[%c5, %c0_36, %c0_37] : memref<10x8x8xf32, #tpu.memory_space<vmem>>, vector<1x8x8xf32>
    %80 = vector.shape_cast %79 : vector<1x8x8xf32> to vector<8x8xf32>
    %cst_38 = arith.constant dense<0.000000e+00> : vector<8x128xf32>
    %81 = tpu.matmul %80, %78, %cst_38 {dimension_numbers = #tpu.dot_dimension_numbers<[1], [0], [0], [1], [0, 0, 1, 1], [], []>} : vector<8x8xf32>, vector<8x128xf32>, vector<8x128xf32> -> vector<8x128xf32>
    %82 = arith.addf %76, %81 : vector<8x128xf32>
    %c2_39 = arith.constant 2 : index
    %c0_40 = arith.constant 0 : index
    %c0_41 = arith.constant 0 : index
    %83 = vector.load %arg3[%c2_39, %c0_40, %c0_41] : memref<4x8x1xf32, #tpu.memory_space<vmem>>, vector<1x8x1xf32>
    %84 = vector.shape_cast %83 : vector<1x8x1xf32> to vector<8x1xf32>
    %85 = vector.broadcast %84 : vector<8x1xf32> to vector<8x128xf32>
    %86 = arith.addf %82, %85 : vector<8x128xf32>
    %cst_42 = arith.constant 1.000000e-01 : f32
    %87 = vector.broadcast %cst_42 : f32 to vector<8x128xf32>
    %88 = arith.mulf %87, %86 : vector<8x128xf32>
    %89 = arith.maximumf %86, %88 : vector<8x128xf32>
    %c9 = arith.constant 9 : index
    %c0_43 = arith.constant 0 : index
    %c0_44 = arith.constant 0 : index
    %90 = vector.load %arg2[%c9, %c0_43, %c0_44] : memref<10x8x8xf32, #tpu.memory_space<vmem>>, vector<1x8x8xf32>
    %91 = vector.shape_cast %90 : vector<1x8x8xf32> to vector<8x8xf32>
    %cst_45 = arith.constant dense<0.000000e+00> : vector<8x128xf32>
    %92 = tpu.matmul %91, %89, %cst_45 {dimension_numbers = #tpu.dot_dimension_numbers<[1], [0], [0], [1], [0, 0, 1, 1], [], []>} : vector<8x8xf32>, vector<8x128xf32>, vector<8x128xf32> -> vector<8x128xf32>
    %c8_i32_46 = arith.constant 8 : i32
    %93 = tpu.dynamic_rotate %89 by %c8_i32_46 dim 1 : vector<8x128xf32>, i32 -> vector<8x128xf32>
    %94 = arith.mulf %93, %35 : vector<8x128xf32>
    %c7 = arith.constant 7 : index
    %c0_47 = arith.constant 0 : index
    %c0_48 = arith.constant 0 : index
    %95 = vector.load %arg2[%c7, %c0_47, %c0_48] : memref<10x8x8xf32, #tpu.memory_space<vmem>>, vector<1x8x8xf32>
    %96 = vector.shape_cast %95 : vector<1x8x8xf32> to vector<8x8xf32>
    %cst_49 = arith.constant dense<0.000000e+00> : vector<8x128xf32>
    %97 = tpu.matmul %96, %94, %cst_49 {dimension_numbers = #tpu.dot_dimension_numbers<[1], [0], [0], [1], [0, 0, 1, 1], [], []>} : vector<8x8xf32>, vector<8x128xf32>, vector<8x128xf32> -> vector<8x128xf32>
    %98 = arith.addf %92, %97 : vector<8x128xf32>
    %c4_i32_50 = arith.constant 4 : i32
    %99 = tpu.dynamic_rotate %89 by %c4_i32_50 dim 1 : vector<8x128xf32>, i32 -> vector<8x128xf32>
    %100 = arith.mulf %99, %31 : vector<8x128xf32>
    %c8 = arith.constant 8 : index
    %c0_51 = arith.constant 0 : index
    %c0_52 = arith.constant 0 : index
    %101 = vector.load %arg2[%c8, %c0_51, %c0_52] : memref<10x8x8xf32, #tpu.memory_space<vmem>>, vector<1x8x8xf32>
    %102 = vector.shape_cast %101 : vector<1x8x8xf32> to vector<8x8xf32>
    %cst_53 = arith.constant dense<0.000000e+00> : vector<8x128xf32>
    %103 = tpu.matmul %102, %100, %cst_53 {dimension_numbers = #tpu.dot_dimension_numbers<[1], [0], [0], [1], [0, 0, 1, 1], [], []>} : vector<8x8xf32>, vector<8x128xf32>, vector<8x128xf32> -> vector<8x128xf32>
    %104 = arith.addf %98, %103 : vector<8x128xf32>
    %c3_54 = arith.constant 3 : index
    %c0_55 = arith.constant 0 : index
    %c0_56 = arith.constant 0 : index
    %105 = vector.load %arg3[%c3_54, %c0_55, %c0_56] : memref<4x8x1xf32, #tpu.memory_space<vmem>>, vector<1x8x1xf32>
    %106 = vector.shape_cast %105 : vector<1x8x1xf32> to vector<8x1xf32>
    %107 = vector.broadcast %106 : vector<8x1xf32> to vector<8x128xf32>
    %108 = arith.addf %104, %107 : vector<8x128xf32>
    %109 = arith.addf %108, %42 : vector<8x128xf32>
    %c0_57 = arith.constant 0 : index
    %c0_58 = arith.constant 0 : index
    %110 = vector.load %arg4[%c0_57, %c0_58] : memref<8x128xf32, #tpu.memory_space<vmem>>, vector<8x128xf32>
    tpu.vector_store %arg4[%c0_57, %c0_58], %109 {strides = array<i32>} : memref<8x128xf32, #tpu.memory_space<vmem>>, vector<8x128xf32>,
    return
  }
  func.func @transform_0(%arg0: i32) -> (i32, i32) {
    %c0_i32 = arith.constant 0 : i32
    %c0_i32_0 = arith.constant 0 : i32
    return %c0_i32, %arg0 : i32, i32
  }
  func.func @transform_1(%arg0: i32) -> (i32, i32, i32) {
    %c0_i32 = arith.constant 0 : i32
    %c0_i32_0 = arith.constant 0 : i32
    %c0_i32_1 = arith.constant 0 : i32
    %c0_i32_2 = arith.constant 0 : i32
    return %c0_i32, %c0_i32_0, %c0_i32_1 : i32, i32, i32
  }
  func.func @transform_2(%arg0: i32) -> (i32, i32, i32) {
    %c0_i32 = arith.constant 0 : i32
    %c0_i32_0 = arith.constant 0 : i32
    %c0_i32_1 = arith.constant 0 : i32
    %c0_i32_2 = arith.constant 0 : i32
    return %c0_i32, %c0_i32_0, %c0_i32_1 : i32, i32, i32
  }
  func.func @transform_3(%arg0: i32) -> (i32, i32) {
    %c0_i32 = arith.constant 0 : i32
    %c0_i32_0 = arith.constant 0 : i32
    return %c0_i32, %arg0 : i32, i32
  }
}

</mosaic_0001>

<llo_original>
// kernel: tpu_custom_call.1
$region0: #{tpu_custom_call.1}
  #allocation0 [shape = 'u32[]', space=smem, size = 0x4, offset = 0x4, fixed_abs, tag = 'smem constant byte address 0x4 - core index']
  #allocation1 [shape = 'u32[144,128]{1,0:T(1,128)}', space=vmem, size = 0x12000, scoped, tag = 'internal scratch']
  %s0 = inlined_call_operand.vmem [shape: f32[4,128], index: 0, kind: input, shape index: {}]
  %s1 = inlined_call_operand.vmem [shape: f32[10,8,8], index: 1, kind: input, shape index: {}]
  %s2 = inlined_call_operand.vmem [shape: f32[4,8,1], index: 2, kind: input, shape index: {}]
  %s3 = inlined_call_operand.hbm [shape: f32[8,128], index: 3, kind: output, shape index: {}]
  %s4 = sld [smem:[#allocation0]]
  $region22: #{tpu_custom_call.1} parent=0
    _
  %s6 = ssub.s32 1, %s4
  %s7 = scalar_select 0, %s6, %s4
  $region1: #{tpu_custom_call.1} parent=0
    #allocation2 [shape = 'u8[4096]{0}', space=vmem, size = 0x1000, scoped, tag = 'output window, operand 0, single buffered']
    #allocation3 [shape = 's32[1]{0}', space=sflag, size = 0x4, scoped, tag = 'scoped memory for tpu_custom_call.1']
    %8 = vsyncpa [#allocation3], 0
    // Predicated region
    $region2: #{tpu_custom_call.1} parent=1 // pred_check
      _
    $region3: #{tpu_custom_call.1} parent=1 // pred_check_branch
      %10 = sbr.rel (0) target = $region5
    $region4: #{tpu_custom_call.1} parent=1 // pred_region
      _
    $region5: #{tpu_custom_call.1} parent=1 // pred_fallthru
      _
    // Predicated region
    $region6: #{tpu_custom_call.1} parent=1 // pred_check
      _
    $region7: #{tpu_custom_call.1} parent=1 // pred_check_branch
      %12 = sbr.rel (0) target = $region9
    $region8: #{tpu_custom_call.1} parent=1 // pred_region
      _
    $region9: #{tpu_custom_call.1} parent=1 // pred_fallthru
      _
    // Predicated region
    $region10: #{tpu_custom_call.1} parent=1 // pred_check
      _
    $region11: #{tpu_custom_call.1} parent=1 // pred_check_branch
      %14 = sbr.rel (0) target = $region13
    $region12: #{tpu_custom_call.1} parent=1 // pred_region
      _
    $region13: #{tpu_custom_call.1} parent=1 // pred_fallthru
      _
    %v15 = vld [vmem:[%s0] sm:$0xf]
    %vm16 = vcmask 1043456
    %v17 = vsel %vm16, %v15, 0.0
    %v18 = vlaneseq
    %v19 = vand.u32 %v18, 127
    %vm20 = vcmp.lt.s32.totalorder %v19, 0
    %v21 = vsub.s32 0, %v19
    %v22 = vsel %vm20, %v21, %v19
    %v23 = vshrl.u32 %v22, 4
    %v24 = vand.u32 %v22, 15
    %v25 = vsub.s32 0, %v24
    %v26 = vsel %vm20, %v25, %v24
    %vm27 = vcmp.ne.s32.totalorder %v26, 0
    %vm28 = vcmp.lt.s32.totalorder %v26, 0
    %vm29 = vmand %vm28, %vm27
    %v30 = vadd.s32 %v26, 16
    %v31 = vsel %vm29, %v30, %v26
    %vm32 = vcmp.ge.s32.totalorder %v31, 1
    %v33 = vsel %vm32, 1, 0
    %v34 = vcvt.s32.f32 %v33
    %vm35 = vcmp.ge.s32.totalorder %v31, 2
    %v36 = vsel %vm35, 1, 0
    %v37 = vcvt.s32.f32 %v36
    %vm38 = vcmp.ge.s32.totalorder %v31, 4
    %v39 = vsel %vm38, 1, 0
    %v40 = vcvt.s32.f32 %v39
    %vm41 = vcmp.ge.s32.totalorder %v31, 8
    %v42 = vsel %vm41, 1, 0
    %v43 = vcvt.s32.f32 %v42
    %v44 = vld [vmem:[%s1] sm:$0xff]
    %v45 = vld [vmem:[%s2] sm:$0xff]
    %47 = vset.pattern.permute.xlu0 0
    %48 = vperm.xlu0 %47, %v45
    %v49 = vpop.permute.xlu0 %48
    %vm51 = vcmask 64512
    %v53 = vsel %vm51, %v44, 0
    %55 = vmatprep.subr.mxu0 0.0
    %56 = vmatpush1.msra.mxu0 %v17
    %57 = vmatprep.subr.mxu0 0.0
    %58 = vmatpush1.msra.mxu0 0.0
    %59 = vmatprep.subr.mxu0 0.0
    %60 = vmatpush1.msra.mxu0 0.0
    %61 = vmatprep.subr.mxu0 0.0
    %62 = vmatpush1.msra.mxu0 0.0
    %63 = vmatprep.subr.mxu0 0.0
    %64 = vmatpush1.msra.mxu0 0.0
    %65 = vmatprep.subr.mxu0 0.0
    %66 = vmatpush1.msra.mxu0 0.0
    %67 = vmatprep.subr.mxu0 0.0
    %68 = vmatpush1.msra.mxu0 0.0
    %69 = vmatprep.subr.mxu0 0.0
    %70 = vmatpush1.msra.mxu0 0.0
    %71 = vmatprep.subr.mxu0 0.0
    %72 = vmatpush1.msra.mxu0 0.0
    %73 = vmatprep.subr.mxu0 0.0
    %74 = vmatpush1.msra.mxu0 0.0
    %75 = vmatprep.subr.mxu0 0.0
    %76 = vmatpush1.msra.mxu0 0.0
    %77 = vmatprep.subr.mxu0 0.0
    %78 = vmatpush1.msra.mxu0 0.0
    %79 = vmatprep.subr.mxu0 0.0
    %80 = vmatpush1.msra.mxu0 0.0
    %81 = vmatprep.subr.mxu0 0.0
    %82 = vmatpush1.msra.mxu0 0.0
    %83 = vmatprep.subr.mxu0 0.0
    %84 = vmatpush1.msra.mxu0 0.0
    %85 = vmatprep.subr.mxu0 0.0
    %86 = vmatpush1.msra.mxu0 0.0
    %87 = vmatprep.subr.mxu0 0.0
    %88 = vmatpush1.msra.mxu0 0.0
    %89 = vmatprep.subr.mxu0 0.0
    %90 = vmatpush1.msra.mxu0 0.0
    %91 = vmatprep.subr.mxu0 0.0
    %92 = vmatpush1.msra.mxu0 0.0
    %93 = vmatprep.subr.mxu0 0.0
    %94 = vmatpush1.msra.mxu0 0.0
    %95 = vmatprep.subr.mxu0 0.0
    %96 = vmatpush1.msra.mxu0 0.0
    %97 = vmatprep.subr.mxu0 0.0
    %98 = vmatpush1.msra.mxu0 0.0
    %99 = vmatprep.subr.mxu0 0.0
    %100 = vmatpush1.msra.mxu0 0.0
    %101 = vmatprep.subr.mxu0 0.0
    %102 = vmatpush1.msra.mxu0 0.0
    %103 = vmatprep.subr.mxu0 0.0
    %104 = vmatpush1.msra.mxu0 0.0
    %105 = vmatprep.subr.mxu0 0.0
    %106 = vmatpush1.msra.mxu0 0.0
    %107 = vmatprep.subr.mxu0 0.0
    %108 = vmatpush1.msra.mxu0 0.0
    %109 = vmatprep.subr.mxu0 0.0
    %110 = vmatpush1.msra.mxu0 0.0
    %111 = vmatprep.subr.mxu0 0.0
    %112 = vmatpush1.msra.mxu0 0.0
    %113 = vmatprep.subr.mxu0 0.0
    %114 = vmatpush1.msra.mxu0 0.0
    %115 = vmatprep.subr.mxu0 0.0
    %116 = vmatpush1.msra.mxu0 0.0
    %117 = vmatprep.subr.mxu0 0.0
    %118 = vmatpush1.msra.mxu0 0.0
    %119 = vmatprep.mubr.f32.mxu0 0.0
    %120 = vmatmul.mubr.f32.gmra.mrb[0].mxu0 %v53
    %v121 = vpop.f32.mrb[0].mxu0
    %v122 = vadd.f32 %v49, %v121
    %v123 = vpop.f32.mrb[0].mxu0
    %124 = vdwg.mxu0
    %v125 = vmul.f32 %v17, 0.1
    %v126 = vmax.f32 %v17, %v125
    %s127 = scalar_lea.vmem %s1, 24
    %v128 = vld [vmem:[%s127] sm:$0xff]
    %129 = vrot.lane.b32.xlu0 %v126, 2
    %v130 = vpop.permute.xlu0 %129
    %v131 = vmul.f32 %v130, %v37
    %s132 = scalar_lea.vmem %s1, 8
    %v133 = vld [vmem:[%s132] sm:$0xff]
    %v135 = vsel %vm51, %v133, 0
    %137 = vmatprep.subr.mxu0 0.0
    %138 = vmatpush1.msra.mxu0 %v131
    %139 = vmatprep.subr.mxu0 0.0
    %140 = vmatpush1.msra.mxu0 0.0
    %141 = vmatprep.subr.mxu0 0.0
    %142 = vmatpush1.msra.mxu0 0.0
    %143 = vmatprep.subr.mxu0 0.0
    %144 = vmatpush1.msra.mxu0 0.0
    %145 = vmatprep.subr.mxu0 0.0
    %146 = vmatpush1.msra.mxu0 0.0
    %147 = vmatprep.subr.mxu0 0.0
    %148 = vmatpush1.msra.mxu0 0.0
    %149 = vmatprep.subr.mxu0 0.0
    %150 = vmatpush1.msra.mxu0 0.0
    %151 = vmatprep.subr.mxu0 0.0
    %152 = vmatpush1.msra.mxu0 0.0
    %153 = vmatprep.subr.mxu0 0.0
    %154 = vmatpush1.msra.mxu0 0.0
    %155 = vmatprep.subr.mxu0 0.0
    %156 = vmatpush1.msra.mxu0 0.0
    %157 = vmatprep.subr.mxu0 0.0
    %158 = vmatpush1.msra.mxu0 0.0
    %159 = vmatprep.subr.mxu0 0.0
    %160 = vmatpush1.msra.mxu0 0.0
    %161 = vmatprep.subr.mxu0 0.0
    %162 = vmatpush1.msra.mxu0 0.0
    %163 = vmatprep.subr.mxu0 0.0
    %164 = vmatpush1.msra.mxu0 0.0
    %165 = vmatprep.subr.mxu0 0.0
    %166 = vmatpush1.msra.mxu0 0.0
    %167 = vmatprep.subr.mxu0 0.0
    %168 = vmatpush1.msra.mxu0 0.0
    %169 = vmatprep.subr.mxu0 0.0
    %170 = vmatpush1.msra.mxu0 0.0
    %171 = vmatprep.subr.mxu0 0.0
    %172 = vmatpush1.msra.mxu0 0.0
    %173 = vmatprep.subr.mxu0 0.0
    %174 = vmatpush1.msra.mxu0 0.0
    %175 = vmatprep.subr.mxu0 0.0
    %176 = vmatpush1.msra.mxu0 0.0
    %177 = vmatprep.subr.mxu0 0.0
    %178 = vmatpush1.msra.mxu0 0.0
    %179 = vmatprep.subr.mxu0 0.0
    %180 = vmatpush1.msra.mxu0 0.0
    %181 = vmatprep.subr.mxu0 0.0
    %182 = vmatpush1.msra.mxu0 0.0
    %183 = vmatprep.subr.mxu0 0.0
    %184 = vmatpush1.msra.mxu0 0.0
    %185 = vmatprep.subr.mxu0 0.0
    %186 = vmatpush1.msra.mxu0 0.0
    %187 = vmatprep.subr.mxu0 0.0
    %188 = vmatpush1.msra.mxu0 0.0
    %189 = vmatprep.subr.mxu0 0.0
    %190 = vmatpush1.msra.mxu0 0.0
    %191 = vmatprep.subr.mxu0 0.0
    %192 = vmatpush1.msra.mxu0 0.0
    %193 = vmatprep.subr.mxu0 0.0
    %194 = vmatpush1.msra.mxu0 0.0
    %195 = vmatprep.subr.mxu0 0.0
    %196 = vmatpush1.msra.mxu0 0.0
    %197 = vmatprep.subr.mxu0 0.0
    %198 = vmatpush1.msra.mxu0 0.0
    %199 = vmatprep.subr.mxu0 0.0
    %200 = vmatpush1.msra.mxu0 0.0
    %201 = vmatprep.mubr.f32.mxu0 0.0
    %202 = vmatmul.mubr.f32.gmra.mrb[0].mxu0 %v135
    %v203 = vpop.f32.mrb[0].mxu0
    %v204 = vadd.f32 0.0, %v203
    %v205 = vpop.f32.mrb[0].mxu0
    %206 = vdwg.mxu0
    %v208 = vsel %vm51, %v128, 0
    %210 = vmatprep.subr.mxu0 0.0
    %211 = vmatpush1.msra.mxu0 %v126
    %212 = vmatprep.subr.mxu0 0.0
    %213 = vmatpush1.msra.mxu0 0.0
    %214 = vmatprep.subr.mxu0 0.0
    %215 = vmatpush1.msra.mxu0 0.0
    %216 = vmatprep.subr.mxu0 0.0
    %217 = vmatpush1.msra.mxu0 0.0
    %218 = vmatprep.subr.mxu0 0.0
    %219 = vmatpush1.msra.mxu0 0.0
    %220 = vmatprep.subr.mxu0 0.0
    %221 = vmatpush1.msra.mxu0 0.0
    %222 = vmatprep.subr.mxu0 0.0
    %223 = vmatpush1.msra.mxu0 0.0
    %224 = vmatprep.subr.mxu0 0.0
    %225 = vmatpush1.msra.mxu0 0.0
    %226 = vmatprep.subr.mxu0 0.0
    %227 = vmatpush1.msra.mxu0 0.0
    %228 = vmatprep.subr.mxu0 0.0
    %229 = vmatpush1.msra.mxu0 0.0
    %230 = vmatprep.subr.mxu0 0.0
    %231 = vmatpush1.msra.mxu0 0.0
    %232 = vmatprep.subr.mxu0 0.0
    %233 = vmatpush1.msra.mxu0 0.0
    %234 = vmatprep.subr.mxu0 0.0
    %235 = vmatpush1.msra.mxu0 0.0
    %236 = vmatprep.subr.mxu0 0.0
    %237 = vmatpush1.msra.mxu0 0.0
    %238 = vmatprep.subr.mxu0 0.0
    %239 = vmatpush1.msra.mxu0 0.0
    %240 = vmatprep.subr.mxu0 0.0
    %241 = vmatpush1.msra.mxu0 0.0
    %242 = vmatprep.subr.mxu0 0.0
    %243 = vmatpush1.msra.mxu0 0.0
    %244 = vmatprep.subr.mxu0 0.0
    %245 = vmatpush1.msra.mxu0 0.0
    %246 = vmatprep.subr.mxu0 0.0
    %247 = vmatpush1.msra.mxu0 0.0
    %248 = vmatprep.subr.mxu0 0.0
    %249 = vmatpush1.msra.mxu0 0.0
    %250 = vmatprep.subr.mxu0 0.0
    %251 = vmatpush1.msra.mxu0 0.0
    %252 = vmatprep.subr.mxu0 0.0
    %253 = vmatpush1.msra.mxu0 0.0
    %254 = vmatprep.subr.mxu0 0.0
    %255 = vmatpush1.msra.mxu0 0.0
    %256 = vmatprep.subr.mxu0 0.0
    %257 = vmatpush1.msra.mxu0 0.0
    %258 = vmatprep.subr.mxu0 0.0
    %259 = vmatpush1.msra.mxu0 0.0
    %260 = vmatprep.subr.mxu0 0.0
    %261 = vmatpush1.msra.mxu0 0.0
    %262 = vmatprep.subr.mxu0 0.0
    %263 = vmatpush1.msra.mxu0 0.0
    %264 = vmatprep.subr.mxu0 0.0
    %265 = vmatpush1.msra.mxu0 0.0
    %266 = vmatprep.subr.mxu0 0.0
    %267 = vmatpush1.msra.mxu0 0.0
    %268 = vmatprep.subr.mxu0 0.0
    %269 = vmatpush1.msra.mxu0 0.0
    %270 = vmatprep.subr.mxu0 0.0
    %271 = vmatpush1.msra.mxu0 0.0
    %272 = vmatprep.subr.mxu0 0.0
    %273 = vmatpush1.msra.mxu0 0.0
    %274 = vmatprep.mubr.f32.mxu0 0.0
    %275 = vmatmul.mubr.f32.gmra.mrb[0].mxu0 %v208
    %v276 = vpop.f32.mrb[0].mxu0
    %v277 = vadd.f32 %v204, %v276
    %v278 = vpop.f32.mrb[0].mxu0
    %279 = vdwg.mxu0
    %280 = vrot.lane.b32.xlu0 %v126, 1
    %v281 = vpop.permute.xlu0 %280
    %v282 = vmul.f32 %v281, %v34
    %s283 = scalar_lea.vmem %s1, 16
    %v284 = vld [vmem:[%s283] sm:$0xff]
    %v286 = vsel %vm51, %v284, 0
    %288 = vmatprep.subr.mxu0 0.0
    %289 = vmatpush1.msra.mxu0 %v282
    %290 = vmatprep.subr.mxu0 0.0
    %291 = vmatpush1.msra.mxu0 0.0
    %292 = vmatprep.subr.mxu0 0.0
    %293 = vmatpush1.msra.mxu0 0.0
    %294 = vmatprep.subr.mxu0 0.0
    %295 = vmatpush1.msra.mxu0 0.0
    %296 = vmatprep.subr.mxu0 0.0
    %297 = vmatpush1.msra.mxu0 0.0
    %298 = vmatprep.subr.mxu0 0.0
    %299 = vmatpush1.msra.mxu0 0.0
    %300 = vmatprep.subr.mxu0 0.0
    %301 = vmatpush1.msra.mxu0 0.0
    %302 = vmatprep.subr.mxu0 0.0
    %303 = vmatpush1.msra.mxu0 0.0
    %304 = vmatprep.subr.mxu0 0.0
    %305 = vmatpush1.msra.mxu0 0.0
    %306 = vmatprep.subr.mxu0 0.0
    %307 = vmatpush1.msra.mxu0 0.0
    %308 = vmatprep.subr.mxu0 0.0
    %309 = vmatpush1.msra.mxu0 0.0
    %310 = vmatprep.subr.mxu0 0.0
    %311 = vmatpush1.msra.mxu0 0.0
    %312 = vmatprep.subr.mxu0 0.0
    %313 = vmatpush1.msra.mxu0 0.0
    %314 = vmatprep.subr.mxu0 0.0
    %315 = vmatpush1.msra.mxu0 0.0
    %316 = vmatprep.subr.mxu0 0.0
    %317 = vmatpush1.msra.mxu0 0.0
    %318 = vmatprep.subr.mxu0 0.0
    %319 = vmatpush1.msra.mxu0 0.0
    %320 = vmatprep.subr.mxu0 0.0
    %321 = vmatpush1.msra.mxu0 0.0
    %322 = vmatprep.subr.mxu0 0.0
    %323 = vmatpush1.msra.mxu0 0.0
    %324 = vmatprep.subr.mxu0 0.0
    %325 = vmatpush1.msra.mxu0 0.0
    %326 = vmatprep.subr.mxu0 0.0
    %327 = vmatpush1.msra.mxu0 0.0
    %328 = vmatprep.subr.mxu0 0.0
    %329 = vmatpush1.msra.mxu0 0.0
    %330 = vmatprep.subr.mxu0 0.0
    %331 = vmatpush1.msra.mxu0 0.0
    %332 = vmatprep.subr.mxu0 0.0
    %333 = vmatpush1.msra.mxu0 0.0
    %334 = vmatprep.subr.mxu0 0.0
    %335 = vmatpush1.msra.mxu0 0.0
    %336 = vmatprep.subr.mxu0 0.0
    %337 = vmatpush1.msra.mxu0 0.0
    %338 = vmatprep.subr.mxu0 0.0
    %339 = vmatpush1.msra.mxu0 0.0
    %340 = vmatprep.subr.mxu0 0.0
    %341 = vmatpush1.msra.mxu0 0.0
    %342 = vmatprep.subr.mxu0 0.0
    %343 = vmatpush1.msra.mxu0 0.0
    %344 = vmatprep.subr.mxu0 0.0
    %345 = vmatpush1.msra.mxu0 0.0
    %346 = vmatprep.subr.mxu0 0.0
    %347 = vmatpush1.msra.mxu0 0.0
    %348 = vmatprep.subr.mxu0 0.0
    %349 = vmatpush1.msra.mxu0 0.0
    %350 = vmatprep.subr.mxu0 0.0
    %351 = vmatpush1.msra.mxu0 0.0
    %352 = vmatprep.mubr.f32.mxu0 0.0
    %353 = vmatmul.mubr.f32.gmra.mrb[0].mxu0 %v286
    %v354 = vpop.f32.mrb[0].mxu0
    %v355 = vadd.f32 0.0, %v354
    %v356 = vpop.f32.mrb[0].mxu0
    %357 = vdwg.mxu0
    %v358 = vadd.f32 %v277, %v355
    %s359 = scalar_lea.vmem %s2, 8
    %v360 = vld [vmem:[%s359] sm:$0xff]
    %362 = vset.pattern.permute.xlu0 0
    %363 = vperm.xlu0 %362, %v360
    %v364 = vpop.permute.xlu0 %363
    %v366 = vadd.f32 %v358, %v364
    %v367 = vmul.f32 %v366, 0.1
    %v368 = vmax.f32 %v366, %v367
    %s369 = scalar_lea.vmem %s1, 48
    %v370 = vld [vmem:[%s369] sm:$0xff]
    %371 = vrot.lane.b32.xlu0 %v368, 4
    %v372 = vpop.permute.xlu0 %371
    %v373 = vmul.f32 %v372, %v40
    %s374 = scalar_lea.vmem %s1, 32
    %v375 = vld [vmem:[%s374] sm:$0xff]
    %v377 = vsel %vm51, %v375, 0
    %379 = vmatprep.subr.mxu0 0.0
    %380 = vmatpush1.msra.mxu0 %v373
    %381 = vmatprep.subr.mxu0 0.0
    %382 = vmatpush1.msra.mxu0 0.0
    %383 = vmatprep.subr.mxu0 0.0
    %384 = vmatpush1.msra.mxu0 0.0
    %385 = vmatprep.subr.mxu0 0.0
    %386 = vmatpush1.msra.mxu0 0.0
    %387 = vmatprep.subr.mxu0 0.0
    %388 = vmatpush1.msra.mxu0 0.0
    %389 = vmatprep.subr.mxu0 0.0
    %390 = vmatpush1.msra.mxu0 0.0
    %391 = vmatprep.subr.mxu0 0.0
    %392 = vmatpush1.msra.mxu0 0.0
    %393 = vmatprep.subr.mxu0 0.0
    %394 = vmatpush1.msra.mxu0 0.0
    %395 = vmatprep.subr.mxu0 0.0
    %396 = vmatpush1.msra.mxu0 0.0
    %397 = vmatprep.subr.mxu0 0.0
    %398 = vmatpush1.msra.mxu0 0.0
    %399 = vmatprep.subr.mxu0 0.0
    %400 = vmatpush1.msra.mxu0 0.0
    %401 = vmatprep.subr.mxu0 0.0
    %402 = vmatpush1.msra.mxu0 0.0
    %403 = vmatprep.subr.mxu0 0.0
    %404 = vmatpush1.msra.mxu0 0.0
    %405 = vmatprep.subr.mxu0 0.0
    %406 = vmatpush1.msra.mxu0 0.0
    %407 = vmatprep.subr.mxu0 0.0
    %408 = vmatpush1.msra.mxu0 0.0
    %409 = vmatprep.subr.mxu0 0.0
    %410 = vmatpush1.msra.mxu0 0.0
    %411 = vmatprep.subr.mxu0 0.0
    %412 = vmatpush1.msra.mxu0 0.0
    %413 = vmatprep.subr.mxu0 0.0
    %414 = vmatpush1.msra.mxu0 0.0
    %415 = vmatprep.subr.mxu0 0.0
    %416 = vmatpush1.msra.mxu0 0.0
    %417 = vmatprep.subr.mxu0 0.0
    %418 = vmatpush1.msra.mxu0 0.0
    %419 = vmatprep.subr.mxu0 0.0
    %420 = vmatpush1.msra.mxu0 0.0
    %421 = vmatprep.subr.mxu0 0.0
    %422 = vmatpush1.msra.mxu0 0.0
    %423 = vmatprep.subr.mxu0 0.0
    %424 = vmatpush1.msra.mxu0 0.0
    %425 = vmatprep.subr.mxu0 0.0
    %426 = vmatpush1.msra.mxu0 0.0
    %427 = vmatprep.subr.mxu0 0.0
    %428 = vmatpush1.msra.mxu0 0.0
    %429 = vmatprep.subr.mxu0 0.0
    %430 = vmatpush1.msra.mxu0 0.0
    %431 = vmatprep.subr.mxu0 0.0
    %432 = vmatpush1.msra.mxu0 0.0
    %433 = vmatprep.subr.mxu0 0.0
    %434 = vmatpush1.msra.mxu0 0.0
    %435 = vmatprep.subr.mxu0 0.0
    %436 = vmatpush1.msra.mxu0 0.0
    %437 = vmatprep.subr.mxu0 0.0
    %438 = vmatpush1.msra.mxu0 0.0
    %439 = vmatprep.subr.mxu0 0.0
    %440 = vmatpush1.msra.mxu0 0.0
    %441 = vmatprep.subr.mxu0 0.0
    %442 = vmatpush1.msra.mxu0 0.0
    %443 = vmatprep.mubr.f32.mxu0 0.0
    %444 = vmatmul.mubr.f32.gmra.mrb[0].mxu0 %v377
    %v445 = vpop.f32.mrb[0].mxu0
    %v446 = vadd.f32 0.0, %v445
    %v447 = vpop.f32.mrb[0].mxu0
    %448 = vdwg.mxu0
    %v450 = vsel %vm51, %v370, 0
    %452 = vmatprep.subr.mxu0 0.0
    %453 = vmatpush1.msra.mxu0 %v368
    %454 = vmatprep.subr.mxu0 0.0
    %455 = vmatpush1.msra.mxu0 0.0
    %456 = vmatprep.subr.mxu0 0.0
    %457 = vmatpush1.msra.mxu0 0.0
    %458 = vmatprep.subr.mxu0 0.0
    %459 = vmatpush1.msra.mxu0 0.0
    %460 = vmatprep.subr.mxu0 0.0
    %461 = vmatpush1.msra.mxu0 0.0
    %462 = vmatprep.subr.mxu0 0.0
    %463 = vmatpush1.msra.mxu0 0.0
    %464 = vmatprep.subr.mxu0 0.0
    %465 = vmatpush1.msra.mxu0 0.0
    %466 = vmatprep.subr.mxu0 0.0
    %467 = vmatpush1.msra.mxu0 0.0
    %468 = vmatprep.subr.mxu0 0.0
    %469 = vmatpush1.msra.mxu0 0.0
    %470 = vmatprep.subr.mxu0 0.0
    %471 = vmatpush1.msra.mxu0 0.0
    %472 = vmatprep.subr.mxu0 0.0
    %473 = vmatpush1.msra.mxu0 0.0
    %474 = vmatprep.subr.mxu0 0.0
    %475 = vmatpush1.msra.mxu0 0.0
    %476 = vmatprep.subr.mxu0 0.0
    %477 = vmatpush1.msra.mxu0 0.0
    %478 = vmatprep.subr.mxu0 0.0
    %479 = vmatpush1.msra.mxu0 0.0
    %480 = vmatprep.subr.mxu0 0.0
    %481 = vmatpush1.msra.mxu0 0.0
    %482 = vmatprep.subr.mxu0 0.0
    %483 = vmatpush1.msra.mxu0 0.0
    %484 = vmatprep.subr.mxu0 0.0
    %485 = vmatpush1.msra.mxu0 0.0
    %486 = vmatprep.subr.mxu0 0.0
    %487 = vmatpush1.msra.mxu0 0.0
    %488 = vmatprep.subr.mxu0 0.0
    %489 = vmatpush1.msra.mxu0 0.0
    %490 = vmatprep.subr.mxu0 0.0
    %491 = vmatpush1.msra.mxu0 0.0
    %492 = vmatprep.subr.mxu0 0.0
    %493 = vmatpush1.msra.mxu0 0.0
    %494 = vmatprep.subr.mxu0 0.0
    %495 = vmatpush1.msra.mxu0 0.0
    %496 = vmatprep.subr.mxu0 0.0
    %497 = vmatpush1.msra.mxu0 0.0
    %498 = vmatprep.subr.mxu0 0.0
    %499 = vmatpush1.msra.mxu0 0.0
    %500 = vmatprep.subr.mxu0 0.0
    %501 = vmatpush1.msra.mxu0 0.0
    %502 = vmatprep.subr.mxu0 0.0
    %503 = vmatpush1.msra.mxu0 0.0
    %504 = vmatprep.subr.mxu0 0.0
    %505 = vmatpush1.msra.mxu0 0.0
    %506 = vmatprep.subr.mxu0 0.0
    %507 = vmatpush1.msra.mxu0 0.0
    %508 = vmatprep.subr.mxu0 0.0
    %509 = vmatpush1.msra.mxu0 0.0
    %510 = vmatprep.subr.mxu0 0.0
    %511 = vmatpush1.msra.mxu0 0.0
    %512 = vmatprep.subr.mxu0 0.0
    %513 = vmatpush1.msra.mxu0 0.0
    %514 = vmatprep.subr.mxu0 0.0
    %515 = vmatpush1.msra.mxu0 0.0
    %516 = vmatprep.mubr.f32.mxu0 0.0
    %517 = vmatmul.mubr.f32.gmra.mrb[0].mxu0 %v450
    %v518 = vpop.f32.mrb[0].mxu0
    %v519 = vadd.f32 %v446, %v518
    %v520 = vpop.f32.mrb[0].mxu0
    %521 = vdwg.mxu0
    %522 = vrot.lane.b32.xlu0 %v368, 2
    %v523 = vpop.permute.xlu0 %522
    %v524 = vmul.f32 %v523, %v37
    %s525 = scalar_lea.vmem %s1, 40
    %v526 = vld [vmem:[%s525] sm:$0xff]
    %v528 = vsel %vm51, %v526, 0
    %530 = vmatprep.subr.mxu0 0.0
    %531 = vmatpush1.msra.mxu0 %v524
    %532 = vmatprep.subr.mxu0 0.0
    %533 = vmatpush1.msra.mxu0 0.0
    %534 = vmatprep.subr.mxu0 0.0
    %535 = vmatpush1.msra.mxu0 0.0
    %536 = vmatprep.subr.mxu0 0.0
    %537 = vmatpush1.msra.mxu0 0.0
    %538 = vmatprep.subr.mxu0 0.0
    %539 = vmatpush1.msra.mxu0 0.0
    %540 = vmatprep.subr.mxu0 0.0
    %541 = vmatpush1.msra.mxu0 0.0
    %542 = vmatprep.subr.mxu0 0.0
    %543 = vmatpush1.msra.mxu0 0.0
    %544 = vmatprep.subr.mxu0 0.0
    %545 = vmatpush1.msra.mxu0 0.0
    %546 = vmatprep.subr.mxu0 0.0
    %547 = vmatpush1.msra.mxu0 0.0
    %548 = vmatprep.subr.mxu0 0.0
    %549 = vmatpush1.msra.mxu0 0.0
    %550 = vmatprep.subr.mxu0 0.0
    %551 = vmatpush1.msra.mxu0 0.0
    %552 = vmatprep.subr.mxu0 0.0
    %553 = vmatpush1.msra.mxu0 0.0
    %554 = vmatprep.subr.mxu0 0.0
    %555 = vmatpush1.msra.mxu0 0.0
    %556 = vmatprep.subr.mxu0 0.0
    %557 = vmatpush1.msra.mxu0 0.0
    %558 = vmatprep.subr.mxu0 0.0
    %559 = vmatpush1.msra.mxu0 0.0
    %560 = vmatprep.subr.mxu0 0.0
    %561 = vmatpush1.msra.mxu0 0.0
    %562 = vmatprep.subr.mxu0 0.0
    %563 = vmatpush1.msra.mxu0 0.0
    %564 = vmatprep.subr.mxu0 0.0
    %565 = vmatpush1.msra.mxu0 0.0
    %566 = vmatprep.subr.mxu0 0.0
    %567 = vmatpush1.msra.mxu0 0.0
    %568 = vmatprep.subr.mxu0 0.0
    %569 = vmatpush1.msra.mxu0 0.0
    %570 = vmatprep.subr.mxu0 0.0
    %571 = vmatpush1.msra.mxu0 0.0
    %572 = vmatprep.subr.mxu0 0.0
    %573 = vmatpush1.msra.mxu0 0.0
    %574 = vmatprep.subr.mxu0 0.0
    %575 = vmatpush1.msra.mxu0 0.0
    %576 = vmatprep.subr.mxu0 0.0
    %577 = vmatpush1.msra.mxu0 0.0
    %578 = vmatprep.subr.mxu0 0.0
    %579 = vmatpush1.msra.mxu0 0.0
    %580 = vmatprep.subr.mxu0 0.0
    %581 = vmatpush1.msra.mxu0 0.0
    %582 = vmatprep.subr.mxu0 0.0
    %583 = vmatpush1.msra.mxu0 0.0
    %584 = vmatprep.subr.mxu0 0.0
    %585 = vmatpush1.msra.mxu0 0.0
    %586 = vmatprep.subr.mxu0 0.0
    %587 = vmatpush1.msra.mxu0 0.0
    %588 = vmatprep.subr.mxu0 0.0
    %589 = vmatpush1.msra.mxu0 0.0
    %590 = vmatprep.subr.mxu0 0.0
    %591 = vmatpush1.msra.mxu0 0.0
    %592 = vmatprep.subr.mxu0 0.0
    %593 = vmatpush1.msra.mxu0 0.0
    %594 = vmatprep.mubr.f32.mxu0 0.0
    %595 = vmatmul.mubr.f32.gmra.mrb[0].mxu0 %v528
    %v596 = vpop.f32.mrb[0].mxu0
    %v597 = vadd.f32 0.0, %v596
    %v598 = vpop.f32.mrb[0].mxu0
    %599 = vdwg.mxu0
    %v600 = vadd.f32 %v519, %v597
    %s601 = scalar_lea.vmem %s2, 16
    %v602 = vld [vmem:[%s601] sm:$0xff]
    %604 = vset.pattern.permute.xlu0 0
    %605 = vperm.xlu0 %604, %v602
    %v606 = vpop.permute.xlu0 %605
    %v608 = vadd.f32 %v600, %v606
    %v609 = vmul.f32 %v608, 0.1
    %v610 = vmax.f32 %v608, %v609
    %s611 = scalar_lea.vmem %s1, 72
    %v612 = vld [vmem:[%s611] sm:$0xff]
    %613 = vrot.lane.b32.xlu0 %v610, 8
    %v614 = vpop.permute.xlu0 %613
    %v615 = vmul.f32 %v614, %v43
    %s616 = scalar_lea.vmem %s1, 56
    %v617 = vld [vmem:[%s616] sm:$0xff]
    %v619 = vsel %vm51, %v617, 0
    %621 = vmatprep.subr.mxu0 0.0
    %622 = vmatpush1.msra.mxu0 %v615
    %623 = vmatprep.subr.mxu0 0.0
    %624 = vmatpush1.msra.mxu0 0.0
    %625 = vmatprep.subr.mxu0 0.0
    %626 = vmatpush1.msra.mxu0 0.0
    %627 = vmatprep.subr.mxu0 0.0
    %628 = vmatpush1.msra.mxu0 0.0
    %629 = vmatprep.subr.mxu0 0.0
    %630 = vmatpush1.msra.mxu0 0.0
    %631 = vmatprep.subr.mxu0 0.0
    %632 = vmatpush1.msra.mxu0 0.0
    %633 = vmatprep.subr.mxu0 0.0
    %634 = vmatpush1.msra.mxu0 0.0
    %635 = vmatprep.subr.mxu0 0.0
    %636 = vmatpush1.msra.mxu0 0.0
    %637 = vmatprep.subr.mxu0 0.0
    %638 = vmatpush1.msra.mxu0 0.0
    %639 = vmatprep.subr.mxu0 0.0
    %640 = vmatpush1.msra.mxu0 0.0
    %641 = vmatprep.subr.mxu0 0.0
    %642 = vmatpush1.msra.mxu0 0.0
    %643 = vmatprep.subr.mxu0 0.0
    %644 = vmatpush1.msra.mxu0 0.0
    %645 = vmatprep.subr.mxu0 0.0
    %646 = vmatpush1.msra.mxu0 0.0
    %647 = vmatprep.subr.mxu0 0.0
    %648 = vmatpush1.msra.mxu0 0.0
    %649 = vmatprep.subr.mxu0 0.0
    %650 = vmatpush1.msra.mxu0 0.0
    %651 = vmatprep.subr.mxu0 0.0
    %652 = vmatpush1.msra.mxu0 0.0
    %653 = vmatprep.subr.mxu0 0.0
    %654 = vmatpush1.msra.mxu0 0.0
    %655 = vmatprep.subr.mxu0 0.0
    %656 = vmatpush1.msra.mxu0 0.0
    %657 = vmatprep.subr.mxu0 0.0
    %658 = vmatpush1.msra.mxu0 0.0
    %659 = vmatprep.subr.mxu0 0.0
    %660 = vmatpush1.msra.mxu0 0.0
    %661 = vmatprep.subr.mxu0 0.0
    %662 = vmatpush1.msra.mxu0 0.0
    %663 = vmatprep.subr.mxu0 0.0
    %664 = vmatpush1.msra.mxu0 0.0
    %665 = vmatprep.subr.mxu0 0.0
    %666 = vmatpush1.msra.mxu0 0.0
    %667 = vmatprep.subr.mxu0 0.0
    %668 = vmatpush1.msra.mxu0 0.0
    %669 = vmatprep.subr.mxu0 0.0
    %670 = vmatpush1.msra.mxu0 0.0
    %671 = vmatprep.subr.mxu0 0.0
    %672 = vmatpush1.msra.mxu0 0.0
    %673 = vmatprep.subr.mxu0 0.0
    %674 = vmatpush1.msra.mxu0 0.0
    %675 = vmatprep.subr.mxu0 0.0
    %676 = vmatpush1.msra.mxu0 0.0
    %677 = vmatprep.subr.mxu0 0.0
    %678 = vmatpush1.msra.mxu0 0.0
    %679 = vmatprep.subr.mxu0 0.0
    %680 = vmatpush1.msra.mxu0 0.0
    %681 = vmatprep.subr.mxu0 0.0
    %682 = vmatpush1.msra.mxu0 0.0
    %683 = vmatprep.subr.mxu0 0.0
    %684 = vmatpush1.msra.mxu0 0.0
    %685 = vmatprep.mubr.f32.mxu0 0.0
    %686 = vmatmul.mubr.f32.gmra.mrb[0].mxu0 %v619
    %v687 = vpop.f32.mrb[0].mxu0
    %v688 = vadd.f32 0.0, %v687
    %v689 = vpop.f32.mrb[0].mxu0
    %690 = vdwg.mxu0
    %v692 = vsel %vm51, %v612, 0
    %694 = vmatprep.subr.mxu0 0.0
    %695 = vmatpush1.msra.mxu0 %v610
    %696 = vmatprep.subr.mxu0 0.0
    %697 = vmatpush1.msra.mxu0 0.0
    %698 = vmatprep.subr.mxu0 0.0
    %699 = vmatpush1.msra.mxu0 0.0
    %700 = vmatprep.subr.mxu0 0.0
    %701 = vmatpush1.msra.mxu0 0.0
    %702 = vmatprep.subr.mxu0 0.0
    %703 = vmatpush1.msra.mxu0 0.0
    %704 = vmatprep.subr.mxu0 0.0
    %705 = vmatpush1.msra.mxu0 0.0
    %706 = vmatprep.subr.mxu0 0.0
    %707 = vmatpush1.msra.mxu0 0.0
    %708 = vmatprep.subr.mxu0 0.0
    %709 = vmatpush1.msra.mxu0 0.0
    %710 = vmatprep.subr.mxu0 0.0
    %711 = vmatpush1.msra.mxu0 0.0
    %712 = vmatprep.subr.mxu0 0.0
    %713 = vmatpush1.msra.mxu0 0.0
    %714 = vmatprep.subr.mxu0 0.0
    %715 = vmatpush1.msra.mxu0 0.0
    %716 = vmatprep.subr.mxu0 0.0
    %717 = vmatpush1.msra.mxu0 0.0
    %718 = vmatprep.subr.mxu0 0.0
    %719 = vmatpush1.msra.mxu0 0.0
    %720 = vmatprep.subr.mxu0 0.0
    %721 = vmatpush1.msra.mxu0 0.0
    %722 = vmatprep.subr.mxu0 0.0
    %723 = vmatpush1.msra.mxu0 0.0
    %724 = vmatprep.subr.mxu0 0.0
    %725 = vmatpush1.msra.mxu0 0.0
    %726 = vmatprep.subr.mxu0 0.0
    %727 = vmatpush1.msra.mxu0 0.0
    %728 = vmatprep.subr.mxu0 0.0
    %729 = vmatpush1.msra.mxu0 0.0
    %730 = vmatprep.subr.mxu0 0.0
    %731 = vmatpush1.msra.mxu0 0.0
    %732 = vmatprep.subr.mxu0 0.0
    %733 = vmatpush1.msra.mxu0 0.0
    %734 = vmatprep.subr.mxu0 0.0
    %735 = vmatpush1.msra.mxu0 0.0
    %736 = vmatprep.subr.mxu0 0.0
    %737 = vmatpush1.msra.mxu0 0.0
    %738 = vmatprep.subr.mxu0 0.0
    %739 = vmatpush1.msra.mxu0 0.0
    %740 = vmatprep.subr.mxu0 0.0
    %741 = vmatpush1.msra.mxu0 0.0
    %742 = vmatprep.subr.mxu0 0.0
    %743 = vmatpush1.msra.mxu0 0.0
    %744 = vmatprep.subr.mxu0 0.0
    %745 = vmatpush1.msra.mxu0 0.0
    %746 = vmatprep.subr.mxu0 0.0
    %747 = vmatpush1.msra.mxu0 0.0
    %748 = vmatprep.subr.mxu0 0.0
    %749 = vmatpush1.msra.mxu0 0.0
    %750 = vmatprep.subr.mxu0 0.0
    %751 = vmatpush1.msra.mxu0 0.0
    %752 = vmatprep.subr.mxu0 0.0
    %753 = vmatpush1.msra.mxu0 0.0
    %754 = vmatprep.subr.mxu0 0.0
    %755 = vmatpush1.msra.mxu0 0.0
    %756 = vmatprep.subr.mxu0 0.0
    %757 = vmatpush1.msra.mxu0 0.0
    %758 = vmatprep.mubr.f32.mxu0 0.0
    %759 = vmatmul.mubr.f32.gmra.mrb[0].mxu0 %v692
    %v760 = vpop.f32.mrb[0].mxu0
    %v761 = vadd.f32 %v688, %v760
    %v762 = vpop.f32.mrb[0].mxu0
    %763 = vdwg.mxu0
    %764 = vrot.lane.b32.xlu0 %v610, 4
    %v765 = vpop.permute.xlu0 %764
    %v766 = vmul.f32 %v765, %v40
    %s767 = scalar_lea.vmem %s1, 64
    %v768 = vld [vmem:[%s767] sm:$0xff]
    %v770 = vsel %vm51, %v768, 0
    %772 = vmatprep.subr.mxu0 0.0
    %773 = vmatpush1.msra.mxu0 %v766
    %774 = vmatprep.subr.mxu0 0.0
    %775 = vmatpush1.msra.mxu0 0.0
    %776 = vmatprep.subr.mxu0 0.0
    %777 = vmatpush1.msra.mxu0 0.0
    %778 = vmatprep.subr.mxu0 0.0
    %779 = vmatpush1.msra.mxu0 0.0
    %780 = vmatprep.subr.mxu0 0.0
    %781 = vmatpush1.msra.mxu0 0.0
    %782 = vmatprep.subr.mxu0 0.0
    %783 = vmatpush1.msra.mxu0 0.0
    %784 = vmatprep.subr.mxu0 0.0
    %785 = vmatpush1.msra.mxu0 0.0
    %786 = vmatprep.subr.mxu0 0.0
    %787 = vmatpush1.msra.mxu0 0.0
    %788 = vmatprep.subr.mxu0 0.0
    %789 = vmatpush1.msra.mxu0 0.0
    %790 = vmatprep.subr.mxu0 0.0
    %791 = vmatpush1.msra.mxu0 0.0
    %792 = vmatprep.subr.mxu0 0.0
    %793 = vmatpush1.msra.mxu0 0.0
    %794 = vmatprep.subr.mxu0 0.0
    %795 = vmatpush1.msra.mxu0 0.0
    %796 = vmatprep.subr.mxu0 0.0
    %797 = vmatpush1.msra.mxu0 0.0
    %798 = vmatprep.subr.mxu0 0.0
    %799 = vmatpush1.msra.mxu0 0.0
    %800 = vmatprep.subr.mxu0 0.0
    %801 = vmatpush1.msra.mxu0 0.0
    %802 = vmatprep.subr.mxu0 0.0
    %803 = vmatpush1.msra.mxu0 0.0
    %804 = vmatprep.subr.mxu0 0.0
    %805 = vmatpush1.msra.mxu0 0.0
    %806 = vmatprep.subr.mxu0 0.0
    %807 = vmatpush1.msra.mxu0 0.0
    %808 = vmatprep.subr.mxu0 0.0
    %809 = vmatpush1.msra.mxu0 0.0
    %810 = vmatprep.subr.mxu0 0.0
    %811 = vmatpush1.msra.mxu0 0.0
    %812 = vmatprep.subr.mxu0 0.0
    %813 = vmatpush1.msra.mxu0 0.0
    %814 = vmatprep.subr.mxu0 0.0
    %815 = vmatpush1.msra.mxu0 0.0
    %816 = vmatprep.subr.mxu0 0.0
    %817 = vmatpush1.msra.mxu0 0.0
    %818 = vmatprep.subr.mxu0 0.0
    %819 = vmatpush1.msra.mxu0 0.0
    %820 = vmatprep.subr.mxu0 0.0
    %821 = vmatpush1.msra.mxu0 0.0
    %822 = vmatprep.subr.mxu0 0.0
    %823 = vmatpush1.msra.mxu0 0.0
    %824 = vmatprep.subr.mxu0 0.0
    %825 = vmatpush1.msra.mxu0 0.0
    %826 = vmatprep.subr.mxu0 0.0
    %827 = vmatpush1.msra.mxu0 0.0
    %828 = vmatprep.subr.mxu0 0.0
    %829 = vmatpush1.msra.mxu0 0.0
    %830 = vmatprep.subr.mxu0 0.0
    %831 = vmatpush1.msra.mxu0 0.0
    %832 = vmatprep.subr.mxu0 0.0
    %833 = vmatpush1.msra.mxu0 0.0
    %834 = vmatprep.subr.mxu0 0.0
    %835 = vmatpush1.msra.mxu0 0.0
    %836 = vmatprep.mubr.f32.mxu0 0.0
    %837 = vmatmul.mubr.f32.gmra.mrb[0].mxu0 %v770
    %v838 = vpop.f32.mrb[0].mxu0
    %v839 = vadd.f32 0.0, %v838
    %v840 = vpop.f32.mrb[0].mxu0
    %841 = vdwg.mxu0
    %v842 = vadd.f32 %v761, %v839
    %s843 = scalar_lea.vmem %s2, 24
    %v844 = vld [vmem:[%s843] sm:$0xff]
    %846 = vset.pattern.permute.xlu0 0
    %847 = vperm.xlu0 %846, %v844
    %v848 = vpop.permute.xlu0 %847
    %v850 = vadd.f32 %v842, %v848
    %v851 = vadd.f32 %v850, %v122
    %852 = vst [vmem:[#allocation2] sm:$0xff] %v851
    // Predicated region
    $region14: #{tpu_custom_call.1} parent=1 // pred_check
      _
    $region15: #{tpu_custom_call.1} parent=1 // pred_check_branch
      %854 = sbr.rel (0) target = $region17
    $region16: #{tpu_custom_call.1} parent=1 // pred_region
      %s856 = ssub.s32 128, 128
      %857 = vsyncadd [#allocation3], %s856
      %s859 = sshll.u32 [#allocation2], 4
      %s860 = int_to_ptr.vmem [resolvable:$true] %s859
      %862 = dma.vmem_to_hbm [thread:$0]  %s860, 128, %s3, [#allocation3]
    $region17: #{tpu_custom_call.1} parent=1 // pred_fallthru
      _
    // Predicated region
    $region18: #{tpu_custom_call.1} parent=1 // pred_check
      _
    $region19: #{tpu_custom_call.1} parent=1 // pred_check_branch
      %864 = sbr.rel (0) target = $region21
    $region20: #{tpu_custom_call.1} parent=1 // pred_region
      %865 = dma.done [#allocation3], 128
    $region21: #{tpu_custom_call.1} parent=1 // pred_fallthru
      _
    %866 = vsyncpa [#allocation3], 1

</llo_original>
